<compile_context>
chip_gen: v6e
topology: v6e:2x2x1
jax: 0.10.0
libtpu: 0.0.40
codegen_flags: <defaults>
</compile_context>

<pallas_src>
import functools

import jax
import jax.numpy as jnp
from jax import lax
from jax.experimental import pallas as pl
from jax.experimental.pallas import tpu as pltpu

_SUB = 8                       # f32 sublane tile
_LANE = 128                    # lane width
_MIN_SPLIT_BLOCK_ROWS = 2048   # keep per-step work big enough to amortize ~0.35us step cost
_PALLAS_MIN_BYTES = 1 << 20    # below this, a fused XLA expression beats any kernel launch


def _cdiv(a, b):
    return -(-a // b)


def _round_up(x, m):
    return _cdiv(x, m) * m


def _device_kind():
    try:
        return jax.devices()[0].device_kind.lower()
    except Exception:  # pragma: no cover - CPU/interpret fallback
        return ""


def _input_vmem_budget_bytes():
    kind = _device_kind()
    if "v5 lite" in kind or "v5lite" in kind or "v5e" in kind:
        return 8 << 20     # v5e: 16 MiB scoped-VMEM default -> keep pipelined inputs at 8 MiB
    return 16 << 20        # v6e / v7x: 32 MiB scoped default -> 16 MiB double-buffered inputs


def _bf16_vpu_available():
    kind = _device_kind()
    return ("v6" in kind) or ("v7" in kind)


def _capsule_loss_kernel(labels_ref, classes_ref, out_ref, *,
                         valid_rows, block_rows, need_mask, bf16_relu):
    classes = classes_ref[...]
    if bf16_relu and classes.dtype == jnp.bfloat16:
        # v6e/v7x: subtract + relu natively in bf16 on the VPU; upcast only for
        # the squares / blend / accumulation (kept in f32 for accuracy).
        nine = jnp.asarray(0.9, classes.dtype)
        tenth = jnp.asarray(0.1, classes.dtype)
        zero = jnp.asarray(0.0, classes.dtype)
        left = jnp.maximum(nine - classes, zero).astype(jnp.float32)
        right = jnp.maximum(classes - tenth, zero).astype(jnp.float32)
    else:
        c32 = classes.astype(jnp.float32)
        left = jnp.maximum(0.9 - c32, 0.0)
        right = jnp.maximum(c32 - 0.1, 0.0)
    left = left * left
    right = right * right

    labels = labels_ref[...].astype(jnp.float32)
    # labels*left + 0.5*(1-labels)*right == 0.5*right + labels*(left - 0.5*right)
    half_right = 0.5 * right
    margin = half_right + labels * (left - half_right)

    if need_mask:
        # Ragged tail block: rows past the true row count hold undefined data.
        row = (pl.program_id(0) * block_rows
               + lax.broadcasted_iota(jnp.int32, margin.shape, 0))
        margin = jnp.where(row < valid_rows, margin, 0.0)

    # Row-axis reduce first (mostly plain VPU vreg adds), then a single
    # cross-lane reduce per block for this block's scalar partial.
    partial = jnp.sum(jnp.sum(margin, axis=0, keepdims=True))
    out_ref[0, 0] = partial


@jax.jit
def _capsule_loss_fused(labels, classes):
    labels = labels.astype(jnp.float32)
    classes = classes.astype(jnp.float32)
    left = jnp.square(jnp.maximum(0.9 - classes, 0.0))
    right = jnp.square(jnp.maximum(classes - 0.1, 0.0))
    margin = labels * left + 0.5 * (1.0 - labels) * right
    return jnp.sum(margin) / labels.shape[0]


def capsule_loss(labels: jax.Array, classes: jax.Array, *,
                 block_rows=None, force_pallas=False) -> jax.Array:
    """Pallas implementation of CapsuleLoss.forward(labels, classes)."""
    assert labels.shape == classes.shape
    batch = labels.shape[0]  # divide by the ORIGINAL batch size

    nbytes = (labels.size * jnp.dtype(labels.dtype).itemsize
              + classes.size * jnp.dtype(classes.dtype).itemsize)
    if not force_pallas and nbytes < _PALLAS_MIN_BYTES:
        # Launch + fixed costs dominate for tiny inputs; fused XLA is faster.
        return _capsule_loss_fused(labels, classes)

    # Keep the arrays in their HBM layout / native dtypes: block the 2-D
    # (rows, cols) arrays directly and cast inside the kernel.  No wrapper-side
    # pad / reshape / astype copies.
    if labels.ndim == 1:
        labels = labels.reshape(-1, 1)
        classes = classes.reshape(-1, 1)
    elif labels.ndim != 2:
        # TODO(synk): >2-D inputs fall back to a (batch, -1) reshape (relayout).
        labels = labels.reshape(batch, -1)
        classes = classes.reshape(batch, -1)

    n_rows, n_cols = labels.shape

    # VMEM footprint per row for BOTH inputs (lanes padded to 128 in VMEM).
    padded_cols = _round_up(n_cols, _LANE)
    row_bytes = padded_cols * (jnp.dtype(labels.dtype).itemsize
                               + jnp.dtype(classes.dtype).itemsize)

    if block_rows is None:
        budget = _input_vmem_budget_bytes()
        max_rows = max(_SUB, (budget // (2 * row_bytes)) // _SUB * _SUB)  # 2 pipeline buffers
        block_rows = max_rows
        # Prefer >= 4 grid steps (megacore sharding on v7x + DMA/compute
        # overlap) once each block still amortizes the per-step overhead.
        if n_rows >= 4 * _MIN_SPLIT_BLOCK_ROWS:
            block_rows = min(block_rows, _round_up(_cdiv(n_rows, 4), _SUB))
    else:
        block_rows = int(block_rows)
        if block_rows < n_rows:
            block_rows = max(_SUB, _round_up(block_rows, _SUB))

    if block_rows >= n_rows:
        block_rows = n_rows  # single block == full array: no masking needed

    num_blocks = _cdiv(n_rows, block_rows)
    need_mask = (n_rows % block_rows) != 0
    bf16_relu = _bf16_vpu_available()

    kernel = functools.partial(
        _capsule_loss_kernel,
        valid_rows=n_rows,
        block_rows=block_rows,
        need_mask=need_mask,
        bf16_relu=bf16_relu,
    )

    partials = pl.pallas_call(
        kernel,
        out_shape=jax.ShapeDtypeStruct((num_blocks, 1), jnp.float32),
        grid=(num_blocks,),
        in_specs=[
            pl.BlockSpec((block_rows, n_cols), lambda i: (i, 0)),
            pl.BlockSpec((block_rows, n_cols), lambda i: (i, 0)),
        ],
        out_specs=pl.BlockSpec((1, 1), lambda i: (i, 0), memory_space=pltpu.SMEM),
        compiler_params=pltpu.CompilerParams(
            dimension_semantics=("parallel",),  # independent partial sums -> megacore OK
        ),
    )(labels, classes)

    return jnp.sum(partials) / jnp.float32(batch)


def capsule_loss_ref(labels, classes):
    labels = labels.astype(jnp.float32)
    classes = classes.astype(jnp.float32)
    left = jnp.maximum(0.9 - classes, 0.0) ** 2
    right = jnp.maximum(classes - 0.1, 0.0) ** 2
    margin = labels * left + 0.5 * (1.0 - labels) * right
    return jnp.sum(margin) / labels.shape[0]


if __name__ == "__main__":
    key = jax.random.PRNGKey(0)
    k1, k2, k3, k4, k5, k6 = jax.random.split(key, 6)

    # 1) Shapes implied by the module: one-hot labels over 10 classes,
    #    capsule "classes" are lengths in [0, 1].  Force the Pallas path.
    B, C = 2, 10
    labels = jax.nn.one_hot(jax.random.randint(k1, (B,), 0, C), C, dtype=jnp.float32)
    classes = jax.random.uniform(k2, (B, C), dtype=jnp.float32)
    loss = jax.block_until_ready(capsule_loss(labels, classes, force_pallas=True))
    ref = capsule_loss_ref(labels, classes)
    assert jnp.allclose(loss, ref, rtol=1e-5, atol=1e-5), (loss, ref)

    # 2) Multi-block grid, even split (no tail mask).
    B2, C2 = 64, 40
    labels2 = jax.nn.one_hot(jax.random.randint(k3, (B2,), 0, C2), C2, dtype=jnp.float32)
    classes2 = jax.random.uniform(k4, (B2, C2), dtype=jnp.float32)
    loss2 = jax.block_until_ready(
        capsule_loss(labels2, classes2, block_rows=8, force_pallas=True))
    ref2 = capsule_loss_ref(labels2, classes2)
    assert jnp.allclose(loss2, ref2, rtol=1e-5, atol=1e-5), (loss2, ref2)

    # 3) Multi-block grid with a ragged tail (exercises the in-kernel mask).
    B3, C3 = 70, 40
    labels3 = jax.nn.one_hot(jax.random.randint(k5, (B3,), 0, C3), C3, dtype=jnp.float32)
    classes3 = jax.random.uniform(k6, (B3, C3), dtype=jnp.float32)
    loss3 = jax.block_until_ready(
        capsule_loss(labels3, classes3, block_rows=16, force_pallas=True))
    ref3 = capsule_loss_ref(labels3, classes3)
    assert jnp.allclose(loss3, ref3, rtol=1e-5, atol=1e-5), (loss3, ref3)

    # 4) Default small-input bypass (fused XLA path).
    loss4 = jax.block_until_ready(capsule_loss(labels, classes))
    assert jnp.allclose(loss4, ref, rtol=1e-5, atol=1e-5), (loss4, ref)

    print("KERNEL_OK")
</pallas_src>

<mosaic_0001>
module attributes {stable_mosaic.version = 11 : i64} {
  func.func @_capsule_loss_kernel(%arg0: i32, %arg1: memref<2x10xf32, #tpu.memory_space<vmem>>, %arg2: memref<2x10xf32, #tpu.memory_space<vmem>>, %arg3: memref<1x1xf32, #tpu.memory_space<smem>>) attributes {dimension_semantics = [#tpu.dimension_semantics<parallel>], iteration_bounds = array<i64: 1>, scalar_prefetch = 0 : i64, scratch_operands = 0 : i64, tpu.core_type = #tpu.core_type<tc>, window_params = [{transform_indices = @transform_0, window_bounds = array<i64: 2, 10>}, {transform_indices = @transform_1, window_bounds = array<i64: 2, 10>}, {transform_indices = @transform_2, window_bounds = array<i64: 1, 1>}]} {
    %c0 = arith.constant 0 : index
    %c0_0 = arith.constant 0 : index
    %0 = vector.load %arg2[%c0, %c0_0] : memref<2x10xf32, #tpu.memory_space<vmem>>, vector<2x10xf32>
    %cst = arith.constant 0.899999976 : f32
    %1 = vector.broadcast %cst : f32 to vector<2x10xf32>
    %2 = arith.subf %1, %0 : vector<2x10xf32>
    %cst_1 = arith.constant 0.000000e+00 : f32
    %3 = vector.broadcast %cst_1 : f32 to vector<2x10xf32>
    %4 = arith.maximumf %2, %3 : vector<2x10xf32>
    %cst_2 = arith.constant 1.000000e-01 : f32
    %5 = vector.broadcast %cst_2 : f32 to vector<2x10xf32>
    %6 = arith.subf %0, %5 : vector<2x10xf32>
    %cst_3 = arith.constant 0.000000e+00 : f32
    %7 = vector.broadcast %cst_3 : f32 to vector<2x10xf32>
    %8 = arith.maximumf %6, %7 : vector<2x10xf32>
    %9 = arith.mulf %4, %4 : vector<2x10xf32>
    %10 = arith.mulf %8, %8 : vector<2x10xf32>
    %c0_4 = arith.constant 0 : index
    %c0_5 = arith.constant 0 : index
    %11 = vector.load %arg1[%c0_4, %c0_5] : memref<2x10xf32, #tpu.memory_space<vmem>>, vector<2x10xf32>
    %cst_6 = arith.constant 5.000000e-01 : f32
    %12 = vector.broadcast %cst_6 : f32 to vector<2x10xf32>
    %13 = arith.mulf %12, %10 : vector<2x10xf32>
    %14 = arith.subf %9, %13 : vector<2x10xf32>
    %15 = arith.mulf %11, %14 : vector<2x10xf32>
    %16 = arith.addf %13, %15 : vector<2x10xf32>
    %cst_7 = arith.constant dense<0.000000e+00> : vector<10xf32>
    %17 = vector.multi_reduction <add>, %16, %cst_7 [0] : vector<2x10xf32> to vector<10xf32>
    %18 = vector.shape_cast %17 : vector<10xf32> to vector<1x10xf32>
    %19 = vector.shape_cast %18 : vector<1x10xf32> to vector<1x1x10xf32>
    %cst_8 = arith.constant dense<0.000000e+00> : vector<1xf32>
    %20 = vector.multi_reduction <add>, %19, %cst_8 [1, 2] : vector<1x1x10xf32> to vector<1xf32>
    %21 = vector.shape_cast %20 : vector<1xf32> to vector<1x1x1xf32>
    %22 = vector.extract %21[0, 0, 0] : f32 from vector<1x1x1xf32>
    %c0_9 = arith.constant 0 : index
    %c0_10 = arith.constant 0 : index
    %23 = memref.load %arg3[%c0_9, %c0_10] : memref<1x1xf32, #tpu.memory_space<smem>>
    memref.store %22, %arg3[%c0_9, %c0_10] : memref<1x1xf32, #tpu.memory_space<smem>>
    return
  }
  func.func @transform_0(%arg0: i32) -> (i32, i32) {
    %c0_i32 = arith.constant 0 : i32
    %c0_i32_0 = arith.constant 0 : i32
    return %arg0, %c0_i32 : i32, i32
  }
  func.func @transform_1(%arg0: i32) -> (i32, i32) {
    %c0_i32 = arith.constant 0 : i32
    %c0_i32_0 = arith.constant 0 : i32
    return %arg0, %c0_i32 : i32, i32
  }
  func.func @transform_2(%arg0: i32) -> (i32, i32) {
    %c0_i32 = arith.constant 0 : i32
    %c0_i32_0 = arith.constant 0 : i32
    return %arg0, %c0_i32 : i32, i32
  }
}

</mosaic_0001>

<llo_original>
// kernel: tpu_custom_call.1
$region0: #{tpu_custom_call.1}
  #allocation0 [shape = 'u32[]', space=smem, size = 0x4, offset = 0x4, fixed_abs, tag = 'smem constant byte address 0x4 - core index']
  #allocation1 [shape = 'u32[144,128]{1,0:T(1,128)}', space=vmem, size = 0x12000, scoped, tag = 'internal scratch']
  %s0 = inlined_call_operand.hbm [shape: f32[2,10], index: 0, kind: input, shape index: {}]
  %s1 = inlined_call_operand.hbm [shape: f32[2,10], index: 1, kind: input, shape index: {}]
  %s2 = inlined_call_operand.hbm [shape: f32[1,1], index: 2, kind: output, shape index: {}]
  %s3 = sld [smem:[#allocation0]]
  $region26: #{tpu_custom_call.1} parent=0
    _
  %s5 = ssub.s32 1, %s3
  %s6 = scalar_select 0, %s5, %s3
  $region1: #{tpu_custom_call.1} parent=0
    #allocation2 [shape = 'u8[1024]{0}', space=vmem, size = 0x400, scoped, tag = 'input window, operand 0, single buffered']
    #allocation3 [shape = 's32[1]{0}', space=sflag, size = 0x4, scoped, tag = 'scoped memory for tpu_custom_call.1']
    #allocation4 [shape = 's32[1]{0}', space=sflag, size = 0x4, scoped, tag = 'scoped memory for tpu_custom_call.1']
    #allocation5 [shape = 'u8[1024]{0}', space=vmem, size = 0x400, scoped, tag = 'input window, operand 1, single buffered']
    #allocation6 [shape = 's32[1]{0}', space=sflag, size = 0x4, scoped, tag = 'scoped memory for tpu_custom_call.1']
    #allocation7 [shape = 'u8[512]{0}', space=smem, size = 0x200, scoped, tag = 'output window, operand 0, single buffered']
    %7 = vsyncpa [#allocation3], 0
    %8 = vsyncpa [#allocation6], 0
    %9 = vsyncpa [#allocation4], 0
    // Predicated region
    $region2: #{tpu_custom_call.1} parent=1 // pred_check
      _
    $region3: #{tpu_custom_call.1} parent=1 // pred_check_branch
      %11 = sbr.rel (0) target = $region5
    $region4: #{tpu_custom_call.1} parent=1 // pred_region
      %s13 = ssub.s32 32, 32
      %14 = vsyncadd [#allocation3], %s13
      %s16 = sshll.u32 [#allocation2], 4
      %s17 = int_to_ptr.vmem [resolvable:$true] %s16
      %19 = dma.hbm_to_vmem [thread:$0]  %s0, 32, %s17, [#allocation3]
    $region5: #{tpu_custom_call.1} parent=1 // pred_fallthru
      _
    // Predicated region
    $region6: #{tpu_custom_call.1} parent=1 // pred_check
      _
    $region7: #{tpu_custom_call.1} parent=1 // pred_check_branch
      %21 = sbr.rel (0) target = $region9
    $region8: #{tpu_custom_call.1} parent=1 // pred_region
      %s23 = ssub.s32 32, 32
      %24 = vsyncadd [#allocation6], %s23
      %s26 = sshll.u32 [#allocation5], 4
      %s27 = int_to_ptr.vmem [resolvable:$true] %s26
      %29 = dma.hbm_to_vmem [thread:$0]  %s1, 32, %s27, [#allocation6]
    $region9: #{tpu_custom_call.1} parent=1 // pred_fallthru
      _
    // Predicated region
    $region10: #{tpu_custom_call.1} parent=1 // pred_check
      _
    $region11: #{tpu_custom_call.1} parent=1 // pred_check_branch
      %31 = sbr.rel (0) target = $region13
    $region12: #{tpu_custom_call.1} parent=1 // pred_region
      %32 = dma.done [#allocation3], 32
    $region13: #{tpu_custom_call.1} parent=1 // pred_fallthru
      _
    // Predicated region
    $region14: #{tpu_custom_call.1} parent=1 // pred_check
      _
    $region15: #{tpu_custom_call.1} parent=1 // pred_check_branch
      %34 = sbr.rel (0) target = $region17
    $region16: #{tpu_custom_call.1} parent=1 // pred_region
      %35 = dma.done [#allocation6], 32
    $region17: #{tpu_custom_call.1} parent=1 // pred_fallthru
      _
    %v36 = vld [vmem:[#allocation5] sm:$0x3]
    %v37 = vsub.f32 0.9, %v36
    %v38 = vmax.f32 %v37, 0.0
    %v39 = vsub.f32 %v36, 0.1
    %v40 = vmax.f32 %v39, 0.0
    %v41 = vmul.f32 %v38, %v38
    %v42 = vmul.f32 %v40, %v40
    %v43 = vld [vmem:[#allocation2] sm:$0x3]
    %v44 = vmul.f32 %v42, 0.5
    %v45 = vsub.f32 %v41, %v44
    %v46 = vmul.f32 %v43, %v45
    %v47 = vadd.f32 %v44, %v46
    %vm48 = vcmask 74752
    %v49 = vsel %vm48, %v47, 0.0
    %v50 = vrot.slane %v49, 4
    %v51 = vadd.f32 %v49, %v50
    %v52 = vrot.slane %v51, 2
    %v53 = vadd.f32 %v51, %v52
    %v54 = vrot.slane %v53, 1
    %v55 = vadd.f32 %v53, %v54
    %vm56 = vcmask 73728
    %v57 = vsel %vm56, %v55, 0.0
    %58 = vadd.xlane.f32.xlu0 %v57
    %v59 = vpop.xlane.xlu0 %58
    %v60 = vrot.slane %v59, 4
    %v61 = vadd.f32 %v59, %v60
    %v62 = vrot.slane %v61, 2
    %v63 = vadd.f32 %v61, %v62
    %v64 = vrot.slane %v63, 1
    %v65 = vadd.f32 %v63, %v64
    %s66 = vtos %v65
    %s67 = scalar_lea.smem [#allocation7], 0
    %68 = sst [smem:[%s67]] %s66
    // Predicated region
    $region18: #{tpu_custom_call.1} parent=1 // pred_check
      _
    $region19: #{tpu_custom_call.1} parent=1 // pred_check_branch
      %70 = sbr.rel (0) target = $region21
    $region20: #{tpu_custom_call.1} parent=1 // pred_region
      %s72 = ssub.s32 16, 16
      %73 = vsyncadd [#allocation4], %s72
      %76 = dma.smem_to_hbm [#allocation7], 16, %s2, [#allocation4]
    $region21: #{tpu_custom_call.1} parent=1 // pred_fallthru
      _
    // Predicated region
    $region22: #{tpu_custom_call.1} parent=1 // pred_check
      _
    $region23: #{tpu_custom_call.1} parent=1 // pred_check_branch
      %78 = sbr.rel (0) target = $region25
    $region24: #{tpu_custom_call.1} parent=1 // pred_region
      %79 = dma.done [#allocation4], 16
    $region25: #{tpu_custom_call.1} parent=1 // pred_fallthru
      _
    %80 = sfence
    %81 = vsyncpa [#allocation3], 1
    %82 = vsyncpa [#allocation6], 1
    %83 = vsyncpa [#allocation4], 1

</llo_original>
